<compile_context>
chip_gen: v5e
topology: v5e:2x2
jax: 0.10.0
libtpu: 0.0.40
codegen_flags: <defaults>
</compile_context>

<pallas_src>
import functools

import jax
import jax.numpy as jnp
import numpy as np
from jax import lax
from jax.experimental import pallas as pl
from jax.experimental.pallas import tpu as pltpu

BASE_VOCAB_SHIFT = 100


def _class_decode_kernel(logits_ref, out_ref, *, coord_vocab_shift, band_cols):
    """Per row (= one class-token position): band-masked argmax + softmax score.

    No vocab-wide softmax is materialized.  The argmax runs directly on the
    logits restricted to the (lane-padded) coord-token band -- exp is monotone,
    so the winner and its first-index tie-breaking match torch.argmax on the
    masked probabilities.  The score is one per-row
        exp(best - m) * reciprocal(sum exp(x - m)).
    """
    x = logits_ref[...]                                          # (rt, V), input dtype
    rt, v = x.shape

    # ---- softmax denominator over the full vocab (f32 accumulation) ----
    m = jnp.max(x, axis=-1, keepdims=True).astype(jnp.float32)   # row max (exact cast)
    e = jnp.exp(x.astype(jnp.float32) - m)                       # only full-width f32 temp
    s = jnp.sum(e, axis=-1, keepdims=True)                       # (rt, 1)

    # ---- band-restricted masked argmax on the raw logits ----
    xb = x[:, :band_cols]                                        # static slice: band columns only
    colb = lax.broadcasted_iota(jnp.int32, (1, band_cols), 1)
    bandb = (colb >= BASE_VOCAB_SHIFT) & (colb < coord_vocab_shift)
    bx = jnp.where(bandb, xb, -jnp.inf)                          # stays in input dtype
    best = jnp.max(bx, axis=-1, keepdims=True)                   # best in-band logit
    # first index achieving the max (matches torch.argmax tie-breaking)
    idx = jnp.min(jnp.where(bx == best, colb, v), axis=-1, keepdims=True)

    cls = jnp.maximum(idx - BASE_VOCAB_SHIFT, 0).astype(jnp.float32)   # < 2^24 -> exact in f32
    score = jnp.exp(best.astype(jnp.float32) - m) * pl.reciprocal(s, approx=False)

    # Pack (class, score) into one (rt, 2) f32 block: a single output DMA per step.
    lane = lax.broadcasted_iota(jnp.int32, (rt, 2), 1)
    out_ref[...] = jnp.where(lane == 0, cls, score)


def _row_tile(nrows, vocab, in_bytes):
    """Row-block size for the class-decode grid.

    VMEM per grid step ~= double-buffered input block (2*rt*V*in_bytes) plus
    ~3 full-width f32 temporaries; budget that to ~24 MiB so it fits under the
    explicit 32 MiB vmem_limit_bytes on every part (v7x: 64 MiB physical).
    For large row counts aim for >= 4 grid steps (>= 2 per v7x TensorCore)
    while never shrinking a step below 256 rows (keeps single-TC v5e/v6e from
    paying per-step overhead for nothing).
    """
    budget = 24 * 1024 * 1024
    per_row = vocab * (2 * in_bytes + 3 * 4)
    cap = (budget // per_row) // 8 * 8
    cap = max(8, min(512, cap))
    if nrows <= cap:
        return nrows                                   # single full-dim block
    if nrows >= 4 * 256:
        cap = min(cap, max(256, (nrows // 4) // 8 * 8))
    return cap


def post_process_tokens(pred_seq_logits, pred_seq, orig_size, unpadded_size,
                        max_input_size, quantization_bins=1000,
                        coord_vocab_shift=1000):
    bs, seqlen, vocab = pred_seq_logits.shape
    assert vocab % 128 == 0, "pad vocab to a multiple of 128 for lane layout"
    assert vocab >= coord_vocab_shift, "vocab must cover the coord token band"
    n_inst = seqlen // 5
    assert n_inst >= 1, "need at least one 5-token instance"
    rows = bs * n_inst

    # -------- class decode: the 4::5 gather is fused into the BlockSpec -------
    if seqlen % 5 == 0:
        # (bs, 5n, V) -> (bs*n, 5V) is a pure view (no copy); index_map selects
        # column-block 4 == the class band [4V, 5V), so only 1/5 of the logits
        # bytes are read from HBM.  Logits keep their incoming dtype (bf16 ok).
        logits_rows = pred_seq_logits.reshape(rows, 5 * vocab)
        col_block = 4
    else:
        # Ragged tail: slicing to (bs, trunc, V) before reshaping would
        # materialize a full-size copy.  Gather just the class rows instead
        # (1/5 of the bytes) with one strided slice, then use column-block 0.
        logits_rows = pred_seq_logits[:, 4:5 * n_inst:5, :].reshape(rows, vocab)
        col_block = 0

    rt = _row_tile(rows, vocab, pred_seq_logits.dtype.itemsize)
    band_cols = min(vocab, ((coord_vocab_shift + 127) // 128) * 128)
    kernel = functools.partial(_class_decode_kernel,
                               coord_vocab_shift=coord_vocab_shift,
                               band_cols=band_cols)
    packed = pl.pallas_call(
        kernel,
        out_shape=jax.ShapeDtypeStruct((rows, 2), jnp.float32),
        grid=(pl.cdiv(rows, rt),),
        in_specs=[pl.BlockSpec((rt, vocab), lambda i: (i, col_block))],
        out_specs=pl.BlockSpec((rt, 2), lambda i: (i, 0)),
        compiler_params=pltpu.CompilerParams(
            dimension_semantics=("parallel",),
            vmem_limit_bytes=32 * 1024 * 1024),
    )(logits_rows)
    pred_class = packed[:, 0].astype(jnp.int32).reshape(bs, n_inst)
    pred_score = packed[:, 1].reshape(bs, n_inst)

    # -------- bbox decode + rescale: a few hundred elementwise ops -> plain jnp
    toks = (pred_seq[:, :5 * n_inst].reshape(bs, n_inst, 5).astype(jnp.float32)
            - coord_vocab_shift)
    # seq_to_bbox('xyxy_name'): box = cat([xmin(tok1), ymin(tok0), xmax(tok3), ymax(tok2)])
    qbox = jnp.stack([toks[..., 1], toks[..., 0], toks[..., 3], toks[..., 2]],
                     axis=-1) / float(quantization_bins - 1)
    qbox = jnp.clip(qbox, 0.0, 1.0)
    # scale_points (eval path): scale = (max_input_size / unpadded_size) * orig_size,
    # multiplied onto coordinate pairs exactly as the PyTorch module does
    # (scale keeps the (h, w) ordering of the size tensors, as in the original).
    scale = (jnp.float32(max_input_size) / unpadded_size.astype(jnp.float32)) \
        * orig_size.astype(jnp.float32)                          # (bs, 2)
    pred_boxes = (qbox.reshape(bs, n_inst, 2, 2)
                  * scale[:, None, None, :]).reshape(bs, n_inst, 4)

    return pred_class, pred_boxes, pred_score


def _reference(pred_seq_logits, pred_seq, orig_size, unpadded_size, max_input_size,
               quantization_bins=1000, coord_vocab_shift=1000):
    """Pure-JAX reference mirroring the PyTorch forward_tokens (eval path)."""
    bs, seqlen, vocab = pred_seq_logits.shape
    if seqlen % 5 != 0:
        pred_seq = pred_seq[:, :-(seqlen % 5)]
        pred_seq_logits = pred_seq_logits[:, :-(seqlen % 5), :]
    p = jax.nn.softmax(pred_seq_logits.astype(jnp.float32), axis=-1)[:, 4::5]
    ids = jnp.arange(vocab)
    mask = ((ids >= BASE_VOCAB_SHIFT) & (ids < coord_vocab_shift)).astype(jnp.float32)
    idx = jnp.argmax(p * mask, axis=-1)
    score = jnp.take_along_axis(p, idx[..., None], axis=-1)[..., 0]
    cls = jnp.maximum(idx - BASE_VOCAB_SHIFT, 0)
    s = pred_seq - coord_vocab_shift
    ymin, xmin, ymax, xmax = s[:, 0::5], s[:, 1::5], s[:, 2::5], s[:, 3::5]
    qbox = jnp.stack([xmin, ymin, xmax, ymax], -1).astype(jnp.float32) \
        / float(quantization_bins - 1)
    qbox = jnp.clip(qbox, 0.0, 1.0)
    scale = (jnp.array([max_input_size, max_input_size], jnp.float32)
             / unpadded_size.astype(jnp.float32)) * orig_size.astype(jnp.float32)
    boxes = (qbox.reshape(bs, -1, 2, 2) * scale[:, None, None, :]).reshape(bs, -1, 4)
    return cls, boxes, score


if __name__ == "__main__":
    key = jax.random.PRNGKey(0)
    bs, seqlen, vocab = 2, 20, 1024          # 4 instances per image; vocab >= coord_vocab_shift
    max_input_size = 640
    k1, k2, k3, k4, k5, k6 = jax.random.split(key, 6)
    pred_seq_logits = jax.random.normal(k1, (bs, seqlen, vocab), jnp.float32)
    pred_seq = jax.random.randint(k2, (bs, seqlen), 0, 2000, jnp.int32)
    orig_size = jax.random.randint(k3, (bs, 2), 200, 800, jnp.int32)       # (h, w)
    unpadded_size = jax.random.randint(k4, (bs, 2), 100, 640, jnp.int32)   # (h, w)

    pred_class, pred_boxes, pred_score = post_process_tokens(
        pred_seq_logits, pred_seq, orig_size, unpadded_size, max_input_size)
    jax.block_until_ready((pred_class, pred_boxes, pred_score))

    # Build the per-image result dicts like PostProcess.forward_tokens returns.
    results = [{"scores": pred_score[i], "labels": pred_class[i], "boxes": pred_boxes[i]}
               for i in range(bs)]

    # ---- correctness check against a pure-JAX reference (seqlen % 5 == 0) ----
    ref_cls, ref_boxes, ref_score = _reference(
        pred_seq_logits, pred_seq, orig_size, unpadded_size, max_input_size)
    np.testing.assert_array_equal(np.asarray(pred_class), np.asarray(ref_cls))
    np.testing.assert_allclose(np.asarray(pred_score), np.asarray(ref_score),
                               rtol=1e-5, atol=1e-6)
    np.testing.assert_allclose(np.asarray(pred_boxes), np.asarray(ref_boxes),
                               rtol=1e-5, atol=1e-4)

    # ---- ragged seqlen (% 5 != 0): exercises the strided class-row gather ----
    seqlen_r = 23
    logits_r = jax.random.normal(k5, (bs, seqlen_r, vocab), jnp.float32)
    seq_r = jax.random.randint(k6, (bs, seqlen_r), 0, 2000, jnp.int32)
    r_cls, r_boxes, r_score = post_process_tokens(
        logits_r, seq_r, orig_size, unpadded_size, max_input_size)
    jax.block_until_ready((r_cls, r_boxes, r_score))
    e_cls, e_boxes, e_score = _reference(
        logits_r, seq_r, orig_size, unpadded_size, max_input_size)
    np.testing.assert_array_equal(np.asarray(r_cls), np.asarray(e_cls))
    np.testing.assert_allclose(np.asarray(r_score), np.asarray(e_score),
                               rtol=1e-5, atol=1e-6)
    np.testing.assert_allclose(np.asarray(r_boxes), np.asarray(e_boxes),
                               rtol=1e-5, atol=1e-4)

    # ---- bf16 logits path (upstream models usually emit bf16): runs end-to-end
    # without any wrapper-side pre-cast to f32.
    bf16_out = post_process_tokens(pred_seq_logits.astype(jnp.bfloat16), pred_seq,
                                   orig_size, unpadded_size, max_input_size)
    jax.block_until_ready(bf16_out)

    print("KERNEL_OK")
</pallas_src>

<mosaic_0001>
module attributes {stable_mosaic.version = 11 : i64} {
  func.func @_class_decode_kernel(%arg0: i32, %arg1: memref<8x1024xf32, #tpu.memory_space<vmem>>, %arg2: memref<8x2xf32, #tpu.memory_space<vmem>>) attributes {dimension_semantics = [#tpu.dimension_semantics<parallel>], iteration_bounds = array<i64: 1>, scalar_prefetch = 0 : i64, scratch_operands = 0 : i64, tpu.core_type = #tpu.core_type<tc>, window_params = [{transform_indices = @transform_0, window_bounds = array<i64: 8, 1024>}, {transform_indices = @transform_1, window_bounds = array<i64: 8, 2>}]} {
    %c0 = arith.constant 0 : index
    %c0_0 = arith.constant 0 : index
    %0 = vector.load %arg1[%c0, %c0_0] : memref<8x1024xf32, #tpu.memory_space<vmem>>, vector<8x1024xf32>
    %cst = arith.constant dense<0xFF800000> : vector<8xf32>
    %1 = vector.multi_reduction <maximumf>, %0, %cst [1] : vector<8x1024xf32> to vector<8xf32>
    %2 = vector.shape_cast %1 : vector<8xf32> to vector<8x1xf32>
    %3 = vector.broadcast %2 : vector<8x1xf32> to vector<8x1024xf32>
    %4 = arith.subf %0, %3 : vector<8x1024xf32>
    %5 = math.exp %4 : vector<8x1024xf32>
    %cst_1 = arith.constant dense<0.000000e+00> : vector<8xf32>
    %6 = vector.multi_reduction <add>, %5, %cst_1 [1] : vector<8x1024xf32> to vector<8xf32>
    %7 = vector.shape_cast %6 : vector<8xf32> to vector<8x1xf32>
    %8 = tpu.iota {dimensions = array<i32: 1>} : vector<1x1024xi32>
    %c100_i32 = arith.constant 100 : i32
    %9 = vector.broadcast %c100_i32 : i32 to vector<1x1024xi32>
    %10 = arith.cmpi sge, %8, %9 : vector<1x1024xi32>
    %c1000_i32 = arith.constant 1000 : i32
    %11 = vector.broadcast %c1000_i32 : i32 to vector<1x1024xi32>
    %12 = arith.cmpi slt, %8, %11 : vector<1x1024xi32>
    %13 = arith.andi %10, %12 : vector<1x1024xi1>
    %cst_2 = arith.constant 0xFF800000 : f32
    %14 = vector.shape_cast %13 : vector<1x1024xi1> to vector<1x1024xi1>
    %15 = vector.broadcast %14 : vector<1x1024xi1> to vector<8x1024xi1>
    %16 = vector.broadcast %cst_2 : f32 to vector<8x1024xf32>
    %17 = arith.select %15, %0, %16 : vector<8x1024xi1>, vector<8x1024xf32>
    %cst_3 = arith.constant dense<0xFF800000> : vector<8xf32>
    %18 = vector.multi_reduction <maximumf>, %17, %cst_3 [1] : vector<8x1024xf32> to vector<8xf32>
    %19 = vector.shape_cast %18 : vector<8xf32> to vector<8x1xf32>
    %20 = vector.broadcast %19 : vector<8x1xf32> to vector<8x1024xf32>
    %21 = arith.cmpf oeq, %17, %20 : vector<8x1024xf32>
    %c1024_i32 = arith.constant 1024 : i32
    %22 = vector.shape_cast %8 : vector<1x1024xi32> to vector<1x1024xi32>
    %23 = vector.broadcast %22 : vector<1x1024xi32> to vector<8x1024xi32>
    %24 = vector.broadcast %c1024_i32 : i32 to vector<8x1024xi32>
    %25 = arith.select %21, %23, %24 : vector<8x1024xi1>, vector<8x1024xi32>
    %cst_4 = arith.constant dense<2147483647> : vector<8xi32>
    %26 = vector.multi_reduction <minsi>, %25, %cst_4 [1] : vector<8x1024xi32> to vector<8xi32>
    %27 = vector.shape_cast %26 : vector<8xi32> to vector<8x1xi32>
    %c100_i32_5 = arith.constant 100 : i32
    %28 = vector.broadcast %c100_i32_5 : i32 to vector<8x1xi32>
    %29 = arith.subi %27, %28 : vector<8x1xi32>
    %c0_i32 = arith.constant 0 : i32
    %30 = vector.broadcast %c0_i32 : i32 to vector<8x1xi32>
    %31 = arith.maxsi %29, %30 : vector<8x1xi32>
    %32 = arith.sitofp %31 : vector<8x1xi32> to vector<8x1xf32>
    %33 = arith.subf %19, %2 : vector<8x1xf32>
    %34 = math.exp %33 : vector<8x1xf32>
    %35 = tpu.reciprocal %7 : vector<8x1xf32> -> vector<8x1xf32>
    %36 = arith.mulf %34, %35 : vector<8x1xf32>
    %37 = tpu.iota {dimensions = array<i32: 1>} : vector<8x2xi32>
    %c0_i32_6 = arith.constant 0 : i32
    %38 = vector.broadcast %c0_i32_6 : i32 to vector<8x2xi32>
    %39 = arith.cmpi eq, %37, %38 : vector<8x2xi32>
    %40 = vector.shape_cast %32 : vector<8x1xf32> to vector<8x1xf32>
    %41 = vector.broadcast %40 : vector<8x1xf32> to vector<8x2xf32>
    %42 = vector.shape_cast %36 : vector<8x1xf32> to vector<8x1xf32>
    %43 = vector.broadcast %42 : vector<8x1xf32> to vector<8x2xf32>
    %44 = arith.select %39, %41, %43 : vector<8x2xi1>, vector<8x2xf32>
    %c0_7 = arith.constant 0 : index
    %c0_8 = arith.constant 0 : index
    %45 = vector.load %arg2[%c0_7, %c0_8] : memref<8x2xf32, #tpu.memory_space<vmem>>, vector<8x2xf32>
    tpu.vector_store %arg2[%c0_7, %c0_8], %44 {strides = array<i32>} : memref<8x2xf32, #tpu.memory_space<vmem>>, vector<8x2xf32>,
    return
  }
  func.func @transform_0(%arg0: i32) -> (i32, i32) {
    %c4_i32 = arith.constant 4 : i32
    %c0_i32 = arith.constant 0 : i32
    return %arg0, %c4_i32 : i32, i32
  }
  func.func @transform_1(%arg0: i32) -> (i32, i32) {
    %c0_i32 = arith.constant 0 : i32
    %c0_i32_0 = arith.constant 0 : i32
    return %arg0, %c0_i32 : i32, i32
  }
}

</mosaic_0001>

<llo_original>
// kernel: tpu_custom_call.1
$region0: #{tpu_custom_call.1}
  #allocation0 [shape = 'u32[]', space=smem, size = 0x4, offset = 0x4, fixed_abs, tag = 'smem constant byte address 0x4 - core index']
  #allocation1 [shape = 'u32[72,128]{1,0:T(1,128)}', space=vmem, size = 0x9000, scoped, tag = 'internal scratch']
  %s0 = inlined_call_operand.hbm [shape: f32[8,5120], index: 0, kind: input, shape index: {}]
  %s1 = inlined_call_operand.vmem [shape: f32[8,2], index: 1, kind: output, shape index: {}]
  %s2 = sld [smem:[#allocation0]]
  $region18: #{tpu_custom_call.1} parent=0
    _
  %s4 = ssub.s32 1, %s2
  %s5 = scalar_select 0, %s4, %s2
  $region1: #{tpu_custom_call.1} parent=0
    #allocation2 [shape = 'u8[32768]{0}', space=vmem, size = 0x8000, scoped, tag = 'input window, operand 0, single buffered']
    #allocation3 [shape = 's32[1]{0}', space=sflag, size = 0x4, scoped, tag = 'scoped memory for tpu_custom_call.1']
    %6 = vsyncpa [#allocation3], 0
    // Predicated region
    $region2: #{tpu_custom_call.1} parent=1 // pred_check
      _
    $region3: #{tpu_custom_call.1} parent=1 // pred_check_branch
      %8 = sbr.rel (0) target = $region5
    $region4: #{tpu_custom_call.1} parent=1 // pred_region
      %10 = vsyncadd [#allocation3], 0
      %s11 = scalar_lea.hbm %s0, 256
      %s13 = sshll.u32 %s11, 4
      %s14 = int_to_ptr.hbm [resolvable:$true] %s13
      %s15 = sshll.u32 [#allocation2], 4
      %s16 = int_to_ptr.vmem [resolvable:$true] %s15
      %18 = dma.hbm_to_vmem [thread:$0]  %s14, 1024, %s16, [#allocation3]
    $region5: #{tpu_custom_call.1} parent=1 // pred_fallthru
      _
    // Predicated region
    $region6: #{tpu_custom_call.1} parent=1 // pred_check
      _
    $region7: #{tpu_custom_call.1} parent=1 // pred_check_branch
      %20 = sbr.rel (0) target = $region9
    $region8: #{tpu_custom_call.1} parent=1 // pred_region
      %22 = dma.done [#allocation3], 1024
    $region9: #{tpu_custom_call.1} parent=1 // pred_fallthru
      _
    %v23 = vld [vmem:[#allocation2] sm:$0xff]
    %v24 = vld [vmem:[#allocation2 + $0x8] sm:$0xff]
    %v25 = vld [vmem:[#allocation2 + $0x10] sm:$0xff]
    %v26 = vld [vmem:[#allocation2 + $0x18] sm:$0xff]
    %v27 = vld [vmem:[#allocation2 + $0x20] sm:$0xff]
    %v28 = vld [vmem:[#allocation2 + $0x28] sm:$0xff]
    %v29 = vld [vmem:[#allocation2 + $0x30] sm:$0xff]
    %v30 = vld [vmem:[#allocation2 + $0x38] sm:$0xff]
    %v31 = vmax.f32 %v23, %v27
    %v32 = vmax.f32 %v24, %v28
    %v33 = vmax.f32 %v25, %v29
    %v34 = vmax.f32 %v26, %v30
    %v35 = vmax.f32 %v31, %v32
    %v36 = vmax.f32 %v33, %v34
    %v37 = vmax.f32 %v35, %v36
    %38 = vmax.xlane.f32.xlu0 %v37
    %v39 = vpop.xlane.xlu0 %38
    %v40 = vsub.f32 %v23, %v39
    %v41 = vsub.f32 %v24, %v39
    %v42 = vsub.f32 %v25, %v39
    %v43 = vsub.f32 %v26, %v39
    %v44 = vsub.f32 %v27, %v39
    %v45 = vsub.f32 %v28, %v39
    %v46 = vsub.f32 %v29, %v39
    %v47 = vsub.f32 %v30, %v39
    %v48 = vmul.f32 %v40, 1.442695
    %v49 = vpow.pop %v48
    %v50 = vmul.f32 %v41, 1.442695
    %v51 = vpow.pop %v50
    %v52 = vmul.f32 %v42, 1.442695
    %v53 = vpow.pop %v52
    %v54 = vmul.f32 %v43, 1.442695
    %v55 = vpow.pop %v54
    %v56 = vmul.f32 %v44, 1.442695
    %v57 = vpow.pop %v56
    %v58 = vmul.f32 %v45, 1.442695
    %v59 = vpow.pop %v58
    %v60 = vmul.f32 %v46, 1.442695
    %v61 = vpow.pop %v60
    %v62 = vmul.f32 %v47, 1.442695
    %v63 = vpow.pop %v62
    %v64 = vadd.f32 %v49, %v51
    %v65 = vadd.f32 %v64, %v53
    %v66 = vadd.f32 %v65, %v55
    %v67 = vadd.f32 %v66, %v57
    %v68 = vadd.f32 %v67, %v59
    %v69 = vadd.f32 %v68, %v61
    %v70 = vadd.f32 %v69, %v63
    %71 = vadd.xlane.f32.xlu0 %v70
    %v72 = vpop.xlane.xlu0 %71
    %v73 = vlaneseq
    %v74 = vand.u32 %v73, 127
    %v75 = vadd.s32 %v74, 128
    %v76 = vadd.s32 %v74, 256
    %v77 = vadd.s32 %v74, 384
    %v78 = vadd.s32 %v74, 512
    %v79 = vadd.s32 %v74, 640
    %v80 = vadd.s32 %v74, 768
    %v81 = vadd.s32 %v74, 896
    %vm82 = vcmp.ge.s32.totalorder %v74, 100
    %vm83 = vcmp.ge.s32.totalorder %v75, 100
    %vm84 = vcmp.ge.s32.totalorder %v76, 100
    %vm85 = vcmp.ge.s32.totalorder %v77, 100
    %vm86 = vcmp.ge.s32.totalorder %v78, 100
    %vm87 = vcmp.ge.s32.totalorder %v79, 100
    %vm88 = vcmp.ge.s32.totalorder %v80, 100
    %vm89 = vcmp.ge.s32.totalorder %v81, 100
    %vm90 = vcmp.lt.s32.totalorder %v74, 1000
    %vm91 = vcmp.lt.s32.totalorder %v75, 1000
    %vm92 = vcmp.lt.s32.totalorder %v76, 1000
    %vm93 = vcmp.lt.s32.totalorder %v77, 1000
    %vm94 = vcmp.lt.s32.totalorder %v78, 1000
    %vm95 = vcmp.lt.s32.totalorder %v79, 1000
    %vm96 = vcmp.lt.s32.totalorder %v80, 1000
    %vm97 = vcmp.lt.s32.totalorder %v81, 1000
    %vm98 = vmand %vm82, %vm90
    %vm99 = vmand %vm83, %vm91
    %vm100 = vmand %vm84, %vm92
    %vm101 = vmand %vm85, %vm93
    %vm102 = vmand %vm86, %vm94
    %vm103 = vmand %vm87, %vm95
    %vm104 = vmand %vm88, %vm96
    %vm105 = vmand %vm89, %vm97
    %v106 = vsel %vm98, 1, 0
    %v107 = vsel %vm99, 1, 0
    %v108 = vsel %vm100, 1, 0
    %v109 = vsel %vm101, 1, 0
    %v110 = vsel %vm102, 1, 0
    %v111 = vsel %vm103, 1, 0
    %v112 = vsel %vm104, 1, 0
    %v113 = vsel %vm105, 1, 0
    %vm114 = vcmp.eq.s32.totalorder %v106, 1
    %vm115 = vcmp.eq.s32.totalorder %v107, 1
    %vm116 = vcmp.eq.s32.totalorder %v108, 1
    %vm117 = vcmp.eq.s32.totalorder %v109, 1
    %vm118 = vcmp.eq.s32.totalorder %v110, 1
    %vm119 = vcmp.eq.s32.totalorder %v111, 1
    %vm120 = vcmp.eq.s32.totalorder %v112, 1
    %vm121 = vcmp.eq.s32.totalorder %v113, 1
    %v122 = vsel %vm114, %v23, -inf
    %v123 = vsel %vm115, %v24, -inf
    %v124 = vsel %vm116, %v25, -inf
    %v125 = vsel %vm117, %v26, -inf
    %v126 = vsel %vm118, %v27, -inf
    %v127 = vsel %vm119, %v28, -inf
    %v128 = vsel %vm120, %v29, -inf
    %v129 = vsel %vm121, %v30, -inf
    %v130 = vmax.f32 %v122, %v126
    %v131 = vmax.f32 %v123, %v127
    %v132 = vmax.f32 %v124, %v128
    %v133 = vmax.f32 %v125, %v129
    %v134 = vmax.f32 %v130, %v131
    %v135 = vmax.f32 %v132, %v133
    %v136 = vmax.f32 %v134, %v135
    %137 = vmax.xlane.f32.xlu0 %v136
    %v138 = vpop.xlane.xlu0 %137
    %vm139 = vcmp.eq.f32.partialorder %v122, %v138
    %vm140 = vcmp.eq.f32.partialorder %v123, %v138
    %vm141 = vcmp.eq.f32.partialorder %v124, %v138
    %vm142 = vcmp.eq.f32.partialorder %v125, %v138
    %vm143 = vcmp.eq.f32.partialorder %v126, %v138
    %vm144 = vcmp.eq.f32.partialorder %v127, %v138
    %vm145 = vcmp.eq.f32.partialorder %v128, %v138
    %vm146 = vcmp.eq.f32.partialorder %v129, %v138
    %v147 = vsel %vm139, %v74, 1024
    %v148 = vsel %vm140, %v75, 1024
    %v149 = vsel %vm141, %v76, 1024
    %v150 = vsel %vm142, %v77, 1024
    %v151 = vsel %vm143, %v78, 1024
    %v152 = vsel %vm144, %v79, 1024
    %v153 = vsel %vm145, %v80, 1024
    %v154 = vsel %vm146, %v81, 1024
    %vm155 = vcmp.lt.s32.totalorder %v147, %v151
    %v156 = vsel %vm155, %v147, %v151
    %vm157 = vcmp.lt.s32.totalorder %v148, %v152
    %v158 = vsel %vm157, %v148, %v152
    %vm159 = vcmp.lt.s32.totalorder %v149, %v153
    %v160 = vsel %vm159, %v149, %v153
    %vm161 = vcmp.lt.s32.totalorder %v150, %v154
    %v162 = vsel %vm161, %v150, %v154
    %vm163 = vcmp.lt.s32.totalorder %v156, %v158
    %v164 = vsel %vm163, %v156, %v158
    %vm165 = vcmp.lt.s32.totalorder %v160, %v162
    %v166 = vsel %vm165, %v160, %v162
    %vm167 = vcmp.lt.s32.totalorder %v164, %v166
    %v168 = vsel %vm167, %v164, %v166
    %v169 = vand.u32 %v168, 65535
    %v170 = vshra.s32 %v168, 16
    %v171 = vcvt.s32.f32 %v169
    %v172 = vcvt.s32.f32 %v170
    %173 = vmin.xlane.f32.xlu0 %v172
    %v174 = vpop.xlane.xlu0 %173
    %vm175 = vcmp.eq.f32.partialorder %v172, %v174
    %v176 = vsel %vm175, %v171, inf
    %177 = vmin.xlane.f32.xlu0 %v176
    %v178 = vpop.xlane.xlu0 %177
    %v179 = vcvt.f32.s32 %v178
    %v180 = vcvt.f32.s32 %v174
    %v181 = vshll.u32 %v180, 16
    %v182 = vadd.s32 %v181, %v179
    %v183 = vsub.s32 %v182, 100
    %vm184 = vcmp.gt.s32.totalorder %v183, 0
    %v185 = vsel %vm184, %v183, 0
    %v186 = vcvt.s32.f32 %v185
    %v187 = vsub.f32 %v138, %v39
    %v188 = vmul.f32 %v187, 1.442695
    %v189 = vpow.pop %v188
    %v190 = vrcp.pop %v72
    %v191 = vmul.f32 %v72, %v190
    %v192 = vsub.f32 1.0, %v191
    %v193 = vmul.f32 %v190, %v192
    %v194 = vadd.f32 %v190, %v193
    %vm195 = vweird.f32 %v72
    %vm196 = vweird.f32 %v190
    %vm197 = vmor %vm195, %vm196
    %v198 = vsel %vm197, %v190, %v194
    %v199 = vand.u32 2147483647, %v72
    %vm200 = vcmp.eq.f32.partialorder %v199, 8.507059e+37
    %v201 = vand.u32 %v72, 2147483648
    %v202 = vor.u32 1.1754944e-38, %v201
    %v203 = vsel %vm200, %v202, %v198
    %v204 = vmul.f32 %v189, %v203
    %vm205 = vcmp.eq.s32.totalorder %v74, 0
    %v206 = vsel %vm205, %v186, %v204
    %vm207 = vcmask 15360
    %208 = vst.msk [vmem:[%s1] sm:$0xff] %vm207, %v206
    // Predicated region
    $region10: #{tpu_custom_call.1} parent=1 // pred_check
      _
    $region11: #{tpu_custom_call.1} parent=1 // pred_check_branch
      %210 = sbr.rel (0) target = $region13
    $region12: #{tpu_custom_call.1} parent=1 // pred_region
      _
    $region13: #{tpu_custom_call.1} parent=1 // pred_fallthru
      _
    // Predicated region
    $region14: #{tpu_custom_call.1} parent=1 // pred_check
      _
    $region15: #{tpu_custom_call.1} parent=1 // pred_check_branch
      %212 = sbr.rel (0) target = $region17
    $region16: #{tpu_custom_call.1} parent=1 // pred_region
      _
    $region17: #{tpu_custom_call.1} parent=1 // pred_fallthru
      _
    %213 = vsyncpa [#allocation3], 1

</llo_original>
